<compile_context>
chip_gen: v7x
topology: tpu7x:2x2x1
jax: 0.10.0
libtpu: 0.0.40
codegen_flags: <defaults>
</compile_context>

<pallas_src>
from functools import partial

import jax
import jax.numpy as jnp
from jax.experimental import pallas as pl
from jax.experimental.pallas import tpu as pltpu


def _round_up(n, m):
    return ((n + m - 1) // m) * m


def _masked_norm_last(v, n_valid, eps=1e-6):
    """Norm over the last axis, counting only the first `n_valid` lanes.

    Precondition: lanes >= n_valid of `v` are exactly zero, so plain sums over
    the padded width equal the sums over the valid width (single fused pass).
    Matches torch: alpha*(x-mean)/(std_unbiased+eps)+bias with alpha=1, bias=0.
    """
    s = jnp.sum(v, axis=-1, keepdims=True)
    ss = jnp.sum(v * v, axis=-1, keepdims=True)
    mean = s / n_valid
    var = (ss - n_valid * mean * mean) / (n_valid - 1)
    var = jnp.maximum(var, 0.0)                              # guard cancellation
    inv = pl.reciprocal(jnp.sqrt(var) + eps, approx=True)    # EUP, not VPU divide
    out = (v - mean) * inv
    if v.shape[-1] == n_valid:                               # no padded lanes
        return out
    lane = jax.lax.broadcasted_iota(jnp.int32, v.shape, dimension=v.ndim - 1)
    return jnp.where(lane < n_valid, out, 0.0)


def feedforward_kernel(x_ref, w1_ref, b1_ref, w2_ref, b2_ref, w3_ref, b3_ref,
                       o_ref, *, hidden, f_out):
    # bf16 MXU inputs, f32 accumulation; bias/ReLU/residual/Norm in f32.
    x = x_ref[...]                                    # (bm, fin_p)  bf16
    w1 = w1_ref[...]                                  # (fin_p, hid_p) bf16
    w2 = w2_ref[...]                                  # (hid_p, hid_p) bf16
    w3 = w3_ref[...]                                  # (hid_p, fout_p) bf16
    b1 = b1_ref[...]                                  # (1, hid_p)  f32
    b2 = b2_ref[...]                                  # (1, hid_p)  f32
    b3 = b3_ref[...]                                  # (1, fout_p) f32

    # x_ = relu(lin1(x))
    h = jnp.maximum(jnp.dot(x, w1, preferred_element_type=jnp.float32) + b1, 0.0)
    # x_ = x_ + relu(lin2(x_))
    h = h + jnp.maximum(
        jnp.dot(h.astype(jnp.bfloat16), w2, preferred_element_type=jnp.float32) + b2, 0.0)
    # x_ = norm1(x_)
    h = _masked_norm_last(h, hidden)
    # x_ = x_ + relu(lin2(drop1(x_)))   (dropout = identity at inference)
    h = h + jnp.maximum(
        jnp.dot(h.astype(jnp.bfloat16), w2, preferred_element_type=jnp.float32) + b2, 0.0)
    # x_ = norm2(x_)
    h = _masked_norm_last(h, hidden)
    # x_ = relu(lin3(drop2(x_)))
    y = jnp.maximum(
        jnp.dot(h.astype(jnp.bfloat16), w3, preferred_element_type=jnp.float32) + b3, 0.0)
    # norm3(x_)  — fout_p is a multiple of 128 -> unmasked, lane-dense store
    o_ref[...] = _masked_norm_last(y, f_out)


@partial(jax.jit, static_argnames=("block_rows", "lane"))
def feedforward_pallas(x2d, params, *, block_rows=256, lane=128):
    """x2d: (tokens, f_in) f32.  params: (w1,b1,w2,b2,w3,b3) in x@W+b layout."""
    w1, b1, w2, b2, w3, b3 = params
    N, f_in = x2d.shape
    hidden = w1.shape[1]
    f_out = w3.shape[1]

    # Pad all feature dims to full 128-lane width (MXU/VPU/store efficiency).
    fin_p = _round_up(f_in, lane)
    hid_p = _round_up(hidden, lane)
    fout_p = _round_up(f_out, lane)

    # Row tile: large (default 256) to feed the MXU and amortize grid-step
    # overhead, but clamped so tiny inputs don't pad to 16x their size.
    bm = _round_up(min(block_rows, _round_up(N, 8)), 8)
    n_pad = _round_up(N, bm)
    grid = (n_pad // bm,)

    f32, bf16 = jnp.float32, jnp.bfloat16
    # Activations streamed per grid step -> bf16 halves their HBM traffic
    # (kernel feeds the MXU in bf16 regardless).
    xp = jnp.zeros((n_pad, fin_p), bf16).at[:N, :f_in].set(x2d.astype(bf16))
    w1p = jnp.zeros((fin_p, hid_p), bf16).at[:f_in, :hidden].set(w1.astype(bf16))
    w2p = jnp.zeros((hid_p, hid_p), bf16).at[:hidden, :hidden].set(w2.astype(bf16))
    w3p = jnp.zeros((hid_p, fout_p), bf16).at[:hidden, :f_out].set(w3.astype(bf16))
    b1p = jnp.zeros((1, hid_p), f32).at[:, :hidden].set(b1.reshape(1, -1).astype(f32))
    b2p = jnp.zeros((1, hid_p), f32).at[:, :hidden].set(b2.reshape(1, -1).astype(f32))
    b3p = jnp.zeros((1, fout_p), f32).at[:, :f_out].set(b3.reshape(1, -1).astype(f32))

    # Explicit scoped-VMEM budget: double-buffered x/out tiles + bf16 weights
    # + f32 bias tiles + in-kernel f32 intermediates, with 2x headroom.
    weight_bytes = 2 * 2 * (fin_p * hid_p + hid_p * hid_p + hid_p * fout_p)
    bias_bytes = 2 * 4 * 8 * (2 * hid_p + fout_p)
    io_bytes = 2 * bm * (2 * fin_p + 4 * fout_p)
    scratch_bytes = 8 * 4 * bm * hid_p
    vmem_limit = int(min(max(2 * (weight_bytes + bias_bytes + io_bytes + scratch_bytes),
                             16 * 1024 * 1024),
                         64 * 1024 * 1024))

    full = lambda i: (0, 0)
    out_padded = pl.pallas_call(
        partial(feedforward_kernel, hidden=hidden, f_out=f_out),
        out_shape=jax.ShapeDtypeStruct((n_pad, fout_p), jnp.float32),
        grid_spec=pltpu.PrefetchScalarGridSpec(
            num_scalar_prefetch=0,
            grid=grid,
            in_specs=[
                pl.BlockSpec((bm, fin_p), lambda i: (i, 0)),
                pl.BlockSpec((fin_p, hid_p), full),
                pl.BlockSpec((1, hid_p), full),
                pl.BlockSpec((hid_p, hid_p), full),
                pl.BlockSpec((1, hid_p), full),
                pl.BlockSpec((hid_p, fout_p), full),
                pl.BlockSpec((1, fout_p), full),
            ],
            out_specs=pl.BlockSpec((bm, fout_p), lambda i: (i, 0)),
        ),
        compiler_params=pltpu.CompilerParams(
            dimension_semantics=("parallel",),
            vmem_limit_bytes=vmem_limit),
    )(xp, w1p, b1p, w2p, b2p, w3p, b3p)

    return out_padded[:N, :f_out]


def _norm_last_ref(v, eps=1e-6):
    n = v.shape[-1]
    mean = jnp.mean(v, axis=-1, keepdims=True)
    diff = v - mean
    var = jnp.sum(diff * diff, axis=-1, keepdims=True) / (n - 1)
    return diff / (jnp.sqrt(var) + eps)


def feedforward_ref(x2d, params):
    # Pure-f32 reference matching the PyTorch module semantics.
    w1, b1, w2, b2, w3, b3 = params
    h = jax.nn.relu(x2d @ w1 + b1)
    h = h + jax.nn.relu(h @ w2 + b2)
    h = _norm_last_ref(h)
    h = h + jax.nn.relu(h @ w2 + b2)
    h = _norm_last_ref(h)
    y = jax.nn.relu(h @ w3 + b3)
    return _norm_last_ref(y)


if __name__ == "__main__":
    # small shapes: batch=2, seq=8, f_in=16, f_out=16, hidden=64 (module default)
    B, S, f_in, f_out, hidden = 2, 8, 16, 16, 64

    key = jax.random.PRNGKey(0)
    kx, k1, k2, k3, k4, k5, k6 = jax.random.split(key, 7)

    x = jax.random.normal(kx, (B, S, f_in), dtype=jnp.float32)

    # deterministic synthetic parameters (nn.Linear weights stored transposed:
    # y = x @ W + b  with  W = W_torch.T)
    w1 = jax.random.normal(k1, (f_in, hidden), dtype=jnp.float32) * 0.1
    b1 = jax.random.normal(k2, (1, hidden), dtype=jnp.float32) * 0.1
    w2 = jax.random.normal(k3, (hidden, hidden), dtype=jnp.float32) * 0.1
    b2 = jax.random.normal(k4, (1, hidden), dtype=jnp.float32) * 0.1
    w3 = jax.random.normal(k5, (hidden, f_out), dtype=jnp.float32) * 0.1
    b3 = jax.random.normal(k6, (1, f_out), dtype=jnp.float32) * 0.1
    params = (w1, b1, w2, b2, w3, b3)

    x2d = x.reshape(B * S, f_in)
    out2d = feedforward_pallas(x2d, params)
    out = out2d.reshape(B, S, f_out)
    jax.block_until_ready(out)

    ref = feedforward_ref(x2d, params).reshape(B, S, f_out)
    assert bool(jnp.all(jnp.isfinite(out))), "non-finite kernel output"
    # Tolerance loosened vs the f32 reference because the kernel uses bf16 MXU
    # inputs (f32 accumulation) and an EUP approximate reciprocal in the norms.
    assert jnp.allclose(out, ref, atol=5e-2, rtol=5e-2), "mismatch vs JAX reference"

    print("KERNEL_OK")
</pallas_src>

<mosaic_0001>
module attributes {stable_mosaic.version = 11 : i64} {
  func.func @feedforward_kernel(%arg0: i32, %arg1: memref<16x128xbf16, #tpu.memory_space<vmem>>, %arg2: memref<128x128xbf16, #tpu.memory_space<vmem>>, %arg3: memref<1x128xf32, #tpu.memory_space<vmem>>, %arg4: memref<128x128xbf16, #tpu.memory_space<vmem>>, %arg5: memref<1x128xf32, #tpu.memory_space<vmem>>, %arg6: memref<128x128xbf16, #tpu.memory_space<vmem>>, %arg7: memref<1x128xf32, #tpu.memory_space<vmem>>, %arg8: memref<16x128xf32, #tpu.memory_space<vmem>>) attributes {dimension_semantics = [#tpu.dimension_semantics<parallel>], iteration_bounds = array<i64: 1>, scalar_prefetch = 0 : i64, scratch_operands = 0 : i64, tpu.core_type = #tpu.core_type<tc>, window_params = [{transform_indices = @transform_0, window_bounds = array<i64: 16, 128>}, {pipeline_mode = #tpu.pipeline_mode<synchronous>, transform_indices = @transform_1, window_bounds = array<i64: 128, 128>}, {pipeline_mode = #tpu.pipeline_mode<synchronous>, transform_indices = @transform_2, window_bounds = array<i64: 1, 128>}, {pipeline_mode = #tpu.pipeline_mode<synchronous>, transform_indices = @transform_3, window_bounds = array<i64: 128, 128>}, {pipeline_mode = #tpu.pipeline_mode<synchronous>, transform_indices = @transform_4, window_bounds = array<i64: 1, 128>}, {pipeline_mode = #tpu.pipeline_mode<synchronous>, transform_indices = @transform_5, window_bounds = array<i64: 128, 128>}, {pipeline_mode = #tpu.pipeline_mode<synchronous>, transform_indices = @transform_6, window_bounds = array<i64: 1, 128>}, {transform_indices = @transform_7, window_bounds = array<i64: 16, 128>}]} {
    %c0 = arith.constant 0 : index
    %c0_0 = arith.constant 0 : index
    %0 = vector.load %arg1[%c0, %c0_0] : memref<16x128xbf16, #tpu.memory_space<vmem>>, vector<16x128xbf16>
    %c0_1 = arith.constant 0 : index
    %c0_2 = arith.constant 0 : index
    %1 = vector.load %arg2[%c0_1, %c0_2] : memref<128x128xbf16, #tpu.memory_space<vmem>>, vector<128x128xbf16>
    %c0_3 = arith.constant 0 : index
    %c0_4 = arith.constant 0 : index
    %2 = vector.load %arg4[%c0_3, %c0_4] : memref<128x128xbf16, #tpu.memory_space<vmem>>, vector<128x128xbf16>
    %c0_5 = arith.constant 0 : index
    %c0_6 = arith.constant 0 : index
    %3 = vector.load %arg6[%c0_5, %c0_6] : memref<128x128xbf16, #tpu.memory_space<vmem>>, vector<128x128xbf16>
    %c0_7 = arith.constant 0 : index
    %c0_8 = arith.constant 0 : index
    %4 = vector.load %arg3[%c0_7, %c0_8] : memref<1x128xf32, #tpu.memory_space<vmem>>, vector<1x128xf32>
    %c0_9 = arith.constant 0 : index
    %c0_10 = arith.constant 0 : index
    %5 = vector.load %arg5[%c0_9, %c0_10] : memref<1x128xf32, #tpu.memory_space<vmem>>, vector<1x128xf32>
    %c0_11 = arith.constant 0 : index
    %c0_12 = arith.constant 0 : index
    %6 = vector.load %arg7[%c0_11, %c0_12] : memref<1x128xf32, #tpu.memory_space<vmem>>, vector<1x128xf32>
    %cst = arith.constant dense<0.000000e+00> : vector<16x128xf32>
    %7 = tpu.matmul %0, %1, %cst {dimension_numbers = #tpu.dot_dimension_numbers<[1], [0], [0], [1], [0, 0, 1, 1], [], []>} : vector<16x128xbf16>, vector<128x128xbf16>, vector<16x128xf32> -> vector<16x128xf32>
    %8 = vector.broadcast %4 : vector<1x128xf32> to vector<16x128xf32>
    %9 = arith.addf %7, %8 : vector<16x128xf32>
    %cst_13 = arith.constant 0.000000e+00 : f32
    %10 = vector.broadcast %cst_13 : f32 to vector<16x128xf32>
    %11 = arith.maximumf %9, %10 : vector<16x128xf32>
    %12 = arith.truncf %11 : vector<16x128xf32> to vector<16x128xbf16>
    %cst_14 = arith.constant dense<0.000000e+00> : vector<16x128xf32>
    %13 = tpu.matmul %12, %2, %cst_14 {dimension_numbers = #tpu.dot_dimension_numbers<[1], [0], [0], [1], [0, 0, 1, 1], [], []>} : vector<16x128xbf16>, vector<128x128xbf16>, vector<16x128xf32> -> vector<16x128xf32>
    %14 = vector.broadcast %5 : vector<1x128xf32> to vector<16x128xf32>
    %15 = arith.addf %13, %14 : vector<16x128xf32>
    %cst_15 = arith.constant 0.000000e+00 : f32
    %16 = vector.broadcast %cst_15 : f32 to vector<16x128xf32>
    %17 = arith.maximumf %15, %16 : vector<16x128xf32>
    %18 = arith.addf %11, %17 : vector<16x128xf32>
    %cst_16 = arith.constant dense<0.000000e+00> : vector<16xf32>
    %19 = vector.multi_reduction <add>, %18, %cst_16 [1] : vector<16x128xf32> to vector<16xf32>
    %20 = vector.shape_cast %19 : vector<16xf32> to vector<16x1xf32>
    %21 = arith.mulf %18, %18 : vector<16x128xf32>
    %cst_17 = arith.constant dense<0.000000e+00> : vector<16xf32>
    %22 = vector.multi_reduction <add>, %21, %cst_17 [1] : vector<16x128xf32> to vector<16xf32>
    %23 = vector.shape_cast %22 : vector<16xf32> to vector<16x1xf32>
    %cst_18 = arith.constant 6.400000e+01 : f32
    %24 = vector.broadcast %cst_18 : f32 to vector<16x1xf32>
    %25 = arith.divf %20, %24 : vector<16x1xf32>
    %cst_19 = arith.constant 6.400000e+01 : f32
    %26 = vector.broadcast %cst_19 : f32 to vector<16x1xf32>
    %27 = arith.mulf %26, %25 : vector<16x1xf32>
    %28 = arith.mulf %27, %25 : vector<16x1xf32>
    %29 = arith.subf %23, %28 : vector<16x1xf32>
    %cst_20 = arith.constant 6.300000e+01 : f32
    %30 = vector.broadcast %cst_20 : f32 to vector<16x1xf32>
    %31 = arith.divf %29, %30 : vector<16x1xf32>
    %cst_21 = arith.constant 0.000000e+00 : f32
    %32 = vector.broadcast %cst_21 : f32 to vector<16x1xf32>
    %33 = arith.maximumf %31, %32 : vector<16x1xf32>
    %34 = math.sqrt %33 : vector<16x1xf32>
    %cst_22 = arith.constant 9.99999997E-7 : f32
    %35 = vector.broadcast %cst_22 : f32 to vector<16x1xf32>
    %36 = arith.addf %34, %35 : vector<16x1xf32>
    %37 = tpu.reciprocal %36 {approx = true} : vector<16x1xf32> -> vector<16x1xf32>
    %38 = vector.broadcast %25 : vector<16x1xf32> to vector<16x128xf32>
    %39 = arith.subf %18, %38 : vector<16x128xf32>
    %40 = vector.broadcast %37 : vector<16x1xf32> to vector<16x128xf32>
    %41 = arith.mulf %39, %40 : vector<16x128xf32>
    %42 = tpu.iota {dimensions = array<i32: 1>} : vector<16x128xi32>
    %c64_i32 = arith.constant 64 : i32
    %43 = vector.broadcast %c64_i32 : i32 to vector<16x128xi32>
    %44 = arith.cmpi slt, %42, %43 : vector<16x128xi32>
    %cst_23 = arith.constant 0.000000e+00 : f32
    %45 = vector.broadcast %cst_23 : f32 to vector<16x128xf32>
    %46 = arith.select %44, %41, %45 : vector<16x128xi1>, vector<16x128xf32>
    %47 = arith.truncf %46 : vector<16x128xf32> to vector<16x128xbf16>
    %cst_24 = arith.constant dense<0.000000e+00> : vector<16x128xf32>
    %48 = tpu.matmul %47, %2, %cst_24 {dimension_numbers = #tpu.dot_dimension_numbers<[1], [0], [0], [1], [0, 0, 1, 1], [], []>} : vector<16x128xbf16>, vector<128x128xbf16>, vector<16x128xf32> -> vector<16x128xf32>
    %49 = vector.broadcast %5 : vector<1x128xf32> to vector<16x128xf32>
    %50 = arith.addf %48, %49 : vector<16x128xf32>
    %cst_25 = arith.constant 0.000000e+00 : f32
    %51 = vector.broadcast %cst_25 : f32 to vector<16x128xf32>
    %52 = arith.maximumf %50, %51 : vector<16x128xf32>
    %53 = arith.addf %46, %52 : vector<16x128xf32>
    %cst_26 = arith.constant dense<0.000000e+00> : vector<16xf32>
    %54 = vector.multi_reduction <add>, %53, %cst_26 [1] : vector<16x128xf32> to vector<16xf32>
    %55 = vector.shape_cast %54 : vector<16xf32> to vector<16x1xf32>
    %56 = arith.mulf %53, %53 : vector<16x128xf32>
    %cst_27 = arith.constant dense<0.000000e+00> : vector<16xf32>
    %57 = vector.multi_reduction <add>, %56, %cst_27 [1] : vector<16x128xf32> to vector<16xf32>
    %58 = vector.shape_cast %57 : vector<16xf32> to vector<16x1xf32>
    %cst_28 = arith.constant 6.400000e+01 : f32
    %59 = vector.broadcast %cst_28 : f32 to vector<16x1xf32>
    %60 = arith.divf %55, %59 : vector<16x1xf32>
    %cst_29 = arith.constant 6.400000e+01 : f32
    %61 = vector.broadcast %cst_29 : f32 to vector<16x1xf32>
    %62 = arith.mulf %61, %60 : vector<16x1xf32>
    %63 = arith.mulf %62, %60 : vector<16x1xf32>
    %64 = arith.subf %58, %63 : vector<16x1xf32>
    %cst_30 = arith.constant 6.300000e+01 : f32
    %65 = vector.broadcast %cst_30 : f32 to vector<16x1xf32>
    %66 = arith.divf %64, %65 : vector<16x1xf32>
    %cst_31 = arith.constant 0.000000e+00 : f32
    %67 = vector.broadcast %cst_31 : f32 to vector<16x1xf32>
    %68 = arith.maximumf %66, %67 : vector<16x1xf32>
    %69 = math.sqrt %68 : vector<16x1xf32>
    %cst_32 = arith.constant 9.99999997E-7 : f32
    %70 = vector.broadcast %cst_32 : f32 to vector<16x1xf32>
    %71 = arith.addf %69, %70 : vector<16x1xf32>
    %72 = tpu.reciprocal %71 {approx = true} : vector<16x1xf32> -> vector<16x1xf32>
    %73 = vector.broadcast %60 : vector<16x1xf32> to vector<16x128xf32>
    %74 = arith.subf %53, %73 : vector<16x128xf32>
    %75 = vector.broadcast %72 : vector<16x1xf32> to vector<16x128xf32>
    %76 = arith.mulf %74, %75 : vector<16x128xf32>
    %77 = tpu.iota {dimensions = array<i32: 1>} : vector<16x128xi32>
    %c64_i32_33 = arith.constant 64 : i32
    %78 = vector.broadcast %c64_i32_33 : i32 to vector<16x128xi32>
    %79 = arith.cmpi slt, %77, %78 : vector<16x128xi32>
    %cst_34 = arith.constant 0.000000e+00 : f32
    %80 = vector.broadcast %cst_34 : f32 to vector<16x128xf32>
    %81 = arith.select %79, %76, %80 : vector<16x128xi1>, vector<16x128xf32>
    %82 = arith.truncf %81 : vector<16x128xf32> to vector<16x128xbf16>
    %cst_35 = arith.constant dense<0.000000e+00> : vector<16x128xf32>
    %83 = tpu.matmul %82, %3, %cst_35 {dimension_numbers = #tpu.dot_dimension_numbers<[1], [0], [0], [1], [0, 0, 1, 1], [], []>} : vector<16x128xbf16>, vector<128x128xbf16>, vector<16x128xf32> -> vector<16x128xf32>
    %84 = vector.broadcast %6 : vector<1x128xf32> to vector<16x128xf32>
    %85 = arith.addf %83, %84 : vector<16x128xf32>
    %cst_36 = arith.constant 0.000000e+00 : f32
    %86 = vector.broadcast %cst_36 : f32 to vector<16x128xf32>
    %87 = arith.maximumf %85, %86 : vector<16x128xf32>
    %cst_37 = arith.constant dense<0.000000e+00> : vector<16xf32>
    %88 = vector.multi_reduction <add>, %87, %cst_37 [1] : vector<16x128xf32> to vector<16xf32>
    %89 = vector.shape_cast %88 : vector<16xf32> to vector<16x1xf32>
    %90 = arith.mulf %87, %87 : vector<16x128xf32>
    %cst_38 = arith.constant dense<0.000000e+00> : vector<16xf32>
    %91 = vector.multi_reduction <add>, %90, %cst_38 [1] : vector<16x128xf32> to vector<16xf32>
    %92 = vector.shape_cast %91 : vector<16xf32> to vector<16x1xf32>
    %cst_39 = arith.constant 1.600000e+01 : f32
    %93 = vector.broadcast %cst_39 : f32 to vector<16x1xf32>
    %94 = arith.divf %89, %93 : vector<16x1xf32>
    %cst_40 = arith.constant 1.600000e+01 : f32
    %95 = vector.broadcast %cst_40 : f32 to vector<16x1xf32>
    %96 = arith.mulf %95, %94 : vector<16x1xf32>
    %97 = arith.mulf %96, %94 : vector<16x1xf32>
    %98 = arith.subf %92, %97 : vector<16x1xf32>
    %cst_41 = arith.constant 1.500000e+01 : f32
    %99 = vector.broadcast %cst_41 : f32 to vector<16x1xf32>
    %100 = arith.divf %98, %99 : vector<16x1xf32>
    %cst_42 = arith.constant 0.000000e+00 : f32
    %101 = vector.broadcast %cst_42 : f32 to vector<16x1xf32>
    %102 = arith.maximumf %100, %101 : vector<16x1xf32>
    %103 = math.sqrt %102 : vector<16x1xf32>
    %cst_43 = arith.constant 9.99999997E-7 : f32
    %104 = vector.broadcast %cst_43 : f32 to vector<16x1xf32>
    %105 = arith.addf %103, %104 : vector<16x1xf32>
    %106 = tpu.reciprocal %105 {approx = true} : vector<16x1xf32> -> vector<16x1xf32>
    %107 = vector.broadcast %94 : vector<16x1xf32> to vector<16x128xf32>
    %108 = arith.subf %87, %107 : vector<16x128xf32>
    %109 = vector.broadcast %106 : vector<16x1xf32> to vector<16x128xf32>
    %110 = arith.mulf %108, %109 : vector<16x128xf32>
    %111 = tpu.iota {dimensions = array<i32: 1>} : vector<16x128xi32>
    %c16_i32 = arith.constant 16 : i32
    %112 = vector.broadcast %c16_i32 : i32 to vector<16x128xi32>
    %113 = arith.cmpi slt, %111, %112 : vector<16x128xi32>
    %cst_44 = arith.constant 0.000000e+00 : f32
    %114 = vector.broadcast %cst_44 : f32 to vector<16x128xf32>
    %115 = arith.select %113, %110, %114 : vector<16x128xi1>, vector<16x128xf32>
    %c0_45 = arith.constant 0 : index
    %c0_46 = arith.constant 0 : index
    %116 = vector.load %arg8[%c0_45, %c0_46] : memref<16x128xf32, #tpu.memory_space<vmem>>, vector<16x128xf32>
    tpu.vector_store %arg8[%c0_45, %c0_46], %115 {strides = array<i32>} : memref<16x128xf32, #tpu.memory_space<vmem>>, vector<16x128xf32>,
    return
  }
  func.func @transform_0(%arg0: i32) -> (i32, i32) {
    %c0_i32 = arith.constant 0 : i32
    %c0_i32_0 = arith.constant 0 : i32
    return %arg0, %c0_i32 : i32, i32
  }
  func.func @transform_1(%arg0: i32) -> (i32, i32) {
    %c0_i32 = arith.constant 0 : i32
    %c0_i32_0 = arith.constant 0 : i32
    %c0_i32_1 = arith.constant 0 : i32
    return %c0_i32, %c0_i32_0 : i32, i32
  }
  func.func @transform_2(%arg0: i32) -> (i32, i32) {
    %c0_i32 = arith.constant 0 : i32
    %c0_i32_0 = arith.constant 0 : i32
    %c0_i32_1 = arith.constant 0 : i32
    return %c0_i32, %c0_i32_0 : i32, i32
  }
  func.func @transform_3(%arg0: i32) -> (i32, i32) {
    %c0_i32 = arith.constant 0 : i32
    %c0_i32_0 = arith.constant 0 : i32
    %c0_i32_1 = arith.constant 0 : i32
    return %c0_i32, %c0_i32_0 : i32, i32
  }
  func.func @transform_4(%arg0: i32) -> (i32, i32) {
    %c0_i32 = arith.constant 0 : i32
    %c0_i32_0 = arith.constant 0 : i32
    %c0_i32_1 = arith.constant 0 : i32
    return %c0_i32, %c0_i32_0 : i32, i32
  }
  func.func @transform_5(%arg0: i32) -> (i32, i32) {
    %c0_i32 = arith.constant 0 : i32
    %c0_i32_0 = arith.constant 0 : i32
    %c0_i32_1 = arith.constant 0 : i32
    return %c0_i32, %c0_i32_0 : i32, i32
  }
  func.func @transform_6(%arg0: i32) -> (i32, i32) {
    %c0_i32 = arith.constant 0 : i32
    %c0_i32_0 = arith.constant 0 : i32
    %c0_i32_1 = arith.constant 0 : i32
    return %c0_i32, %c0_i32_0 : i32, i32
  }
  func.func @transform_7(%arg0: i32) -> (i32, i32) {
    %c0_i32 = arith.constant 0 : i32
    %c0_i32_0 = arith.constant 0 : i32
    return %arg0, %c0_i32 : i32, i32
  }
}

</mosaic_0001>

<llo_original>
// kernel: feedforward_pallas.1
$region0: #{feedforward_pallas.1}
  #allocation0 [shape = 'u32[]', space=smem, size = 0x4, offset = 0x4, fixed_abs, tag = 'smem constant byte address 0x4 - core index']
  #allocation1 [shape = 'u32[144,128]{1,0:T(1,128)}', space=vmem, size = 0x12000, scoped, tag = 'internal scratch']
  %s0 = inlined_call_operand.vmem [shape: bf16[16,128], index: 0, kind: input, shape index: {}]
  %s1 = inlined_call_operand.vmem [shape: bf16[128,128], index: 1, kind: input, shape index: {}]
  %s2 = inlined_call_operand.vmem [shape: f32[1,128], index: 2, kind: input, shape index: {}]
  %s3 = inlined_call_operand.vmem [shape: bf16[128,128], index: 3, kind: input, shape index: {}]
  %s4 = inlined_call_operand.vmem [shape: f32[1,128], index: 4, kind: input, shape index: {}]
  %s5 = inlined_call_operand.vmem [shape: bf16[128,128], index: 5, kind: input, shape index: {}]
  %s6 = inlined_call_operand.vmem [shape: f32[1,128], index: 6, kind: input, shape index: {}]
  %s7 = inlined_call_operand.hbm [shape: f32[16,128], index: 7, kind: output, shape index: {}]
  %s8 = sld [smem:[#allocation0]]
  $region38: #{feedforward_pallas.1} parent=0
    _
  %s10 = ssub.s32 1, %s8
  %s11 = scalar_select 0, %s10, %s8
  $region1: #{feedforward_pallas.1} parent=0
    #allocation2 [shape = 'u8[8192]{0}', space=vmem, size = 0x2000, scoped, tag = 'output window, operand 0, single buffered']
    #allocation3 [shape = 's32[1]{0}', space=sflag, size = 0x4, scoped, tag = 'scoped memory for feedforward_pallas.1']
    %12 = vsyncpa [#allocation3], 0
    // Predicated region
    $region2: #{feedforward_pallas.1} parent=1 // pred_check
      _
    $region3: #{feedforward_pallas.1} parent=1 // pred_check_branch
      %14 = sbr.rel (0) target = $region5
    $region4: #{feedforward_pallas.1} parent=1 // pred_region
      _
    $region5: #{feedforward_pallas.1} parent=1 // pred_fallthru
      _
    // Predicated region
    $region6: #{feedforward_pallas.1} parent=1 // pred_check
      _
    $region7: #{feedforward_pallas.1} parent=1 // pred_check_branch
      %16 = sbr.rel (0) target = $region9
    $region8: #{feedforward_pallas.1} parent=1 // pred_region
      _
    $region9: #{feedforward_pallas.1} parent=1 // pred_fallthru
      _
    // Predicated region
    $region10: #{feedforward_pallas.1} parent=1 // pred_check
      _
    $region11: #{feedforward_pallas.1} parent=1 // pred_check_branch
      %18 = sbr.rel (0) target = $region13
    $region12: #{feedforward_pallas.1} parent=1 // pred_region
      _
    $region13: #{feedforward_pallas.1} parent=1 // pred_fallthru
      _
    // Predicated region
    $region14: #{feedforward_pallas.1} parent=1 // pred_check
      _
    $region15: #{feedforward_pallas.1} parent=1 // pred_check_branch
      %20 = sbr.rel (0) target = $region17
    $region16: #{feedforward_pallas.1} parent=1 // pred_region
      _
    $region17: #{feedforward_pallas.1} parent=1 // pred_fallthru
      _
    // Predicated region
    $region18: #{feedforward_pallas.1} parent=1 // pred_check
      _
    $region19: #{feedforward_pallas.1} parent=1 // pred_check_branch
      %22 = sbr.rel (0) target = $region21
    $region20: #{feedforward_pallas.1} parent=1 // pred_region
      _
    $region21: #{feedforward_pallas.1} parent=1 // pred_fallthru
      _
    // Predicated region
    $region22: #{feedforward_pallas.1} parent=1 // pred_check
      _
    $region23: #{feedforward_pallas.1} parent=1 // pred_check_branch
      %24 = sbr.rel (0) target = $region25
    $region24: #{feedforward_pallas.1} parent=1 // pred_region
      _
    $region25: #{feedforward_pallas.1} parent=1 // pred_fallthru
      _
    // Predicated region
    $region26: #{feedforward_pallas.1} parent=1 // pred_check
      _
    $region27: #{feedforward_pallas.1} parent=1 // pred_check_branch
      %26 = sbr.rel (0) target = $region29
    $region28: #{feedforward_pallas.1} parent=1 // pred_region
      _
    $region29: #{feedforward_pallas.1} parent=1 // pred_fallthru
      _
    %v28 = vld [vmem:[%s0] sm:$0xf]
    %v29 = vld [vmem:[%s0 + $0x4] sm:$0xf]
    %v30 = vld [vmem:[%s1] sm:$0xf]
    %v31 = vld [vmem:[%s1 + $0x4] sm:$0xf]
    %v32 = vld [vmem:[%s1 + $0x8] sm:$0xf]
    %v33 = vld [vmem:[%s1 + $0xc] sm:$0xf]
    %v34 = vld [vmem:[%s1 + $0x10] sm:$0xf]
    %v35 = vld [vmem:[%s1 + $0x14] sm:$0xf]
    %v36 = vld [vmem:[%s1 + $0x18] sm:$0xf]
    %v37 = vld [vmem:[%s1 + $0x1c] sm:$0xf]
    %v38 = vld [vmem:[%s1 + $0x20] sm:$0xf]
    %v39 = vld [vmem:[%s1 + $0x24] sm:$0xf]
    %v40 = vld [vmem:[%s1 + $0x28] sm:$0xf]
    %v41 = vld [vmem:[%s1 + $0x2c] sm:$0xf]
    %v42 = vld [vmem:[%s1 + $0x30] sm:$0xf]
    %v43 = vld [vmem:[%s1 + $0x34] sm:$0xf]
    %v44 = vld [vmem:[%s1 + $0x38] sm:$0xf]
    %v45 = vld [vmem:[%s1 + $0x3c] sm:$0xf]
    %v46 = vld [vmem:[%s3] sm:$0xf]
    %v47 = vld [vmem:[%s3 + $0x4] sm:$0xf]
    %v48 = vld [vmem:[%s3 + $0x8] sm:$0xf]
    %v49 = vld [vmem:[%s3 + $0xc] sm:$0xf]
    %v50 = vld [vmem:[%s3 + $0x10] sm:$0xf]
    %v51 = vld [vmem:[%s3 + $0x14] sm:$0xf]
    %v52 = vld [vmem:[%s3 + $0x18] sm:$0xf]
    %v53 = vld [vmem:[%s3 + $0x1c] sm:$0xf]
    %v54 = vld [vmem:[%s3 + $0x20] sm:$0xf]
    %v55 = vld [vmem:[%s3 + $0x24] sm:$0xf]
    %v56 = vld [vmem:[%s3 + $0x28] sm:$0xf]
    %v57 = vld [vmem:[%s3 + $0x2c] sm:$0xf]
    %v58 = vld [vmem:[%s3 + $0x30] sm:$0xf]
    %v59 = vld [vmem:[%s3 + $0x34] sm:$0xf]
    %v60 = vld [vmem:[%s3 + $0x38] sm:$0xf]
    %v61 = vld [vmem:[%s3 + $0x3c] sm:$0xf]
    %v62 = vld [vmem:[%s5] sm:$0xf]
    %v63 = vld [vmem:[%s5 + $0x4] sm:$0xf]
    %v64 = vld [vmem:[%s5 + $0x8] sm:$0xf]
    %v65 = vld [vmem:[%s5 + $0xc] sm:$0xf]
    %v66 = vld [vmem:[%s5 + $0x10] sm:$0xf]
    %v67 = vld [vmem:[%s5 + $0x14] sm:$0xf]
    %v68 = vld [vmem:[%s5 + $0x18] sm:$0xf]
    %v69 = vld [vmem:[%s5 + $0x1c] sm:$0xf]
    %v70 = vld [vmem:[%s5 + $0x20] sm:$0xf]
    %v71 = vld [vmem:[%s5 + $0x24] sm:$0xf]
    %v72 = vld [vmem:[%s5 + $0x28] sm:$0xf]
    %v73 = vld [vmem:[%s5 + $0x2c] sm:$0xf]
    %v74 = vld [vmem:[%s5 + $0x30] sm:$0xf]
    %v75 = vld [vmem:[%s5 + $0x34] sm:$0xf]
    %v76 = vld [vmem:[%s5 + $0x38] sm:$0xf]
    %v77 = vld [vmem:[%s5 + $0x3c] sm:$0xf]
    %v78 = vld [vmem:[%s2] sm:$0x1]
    %v79 = vld [vmem:[%s4] sm:$0x1]
    %v80 = vld [vmem:[%s6] sm:$0x1]
    %v82 = vlaneseq
    %v83 = vshrl.u32 %v82, 7
    %v84 = vsub.s32 0, %v83
    %v85 = vrot.slane %v78, %v84
    %v89 = vunpack.c.l.b16 %v28
    %v90 = vunpack.c.l.b16 %v29
    %v91 = vpack.c.b16 %v90, %v89
    %v109 = vunpack.c.l.b16 %v30
    %v110 = vunpack.c.l.b16 %v31
    %v111 = vunpack.c.l.b16 %v32
    %v112 = vunpack.c.l.b16 %v33
    %v113 = vunpack.c.l.b16 %v34
    %v114 = vunpack.c.l.b16 %v35
    %v115 = vunpack.c.l.b16 %v36
    %v116 = vunpack.c.l.b16 %v37
    %v117 = vunpack.c.l.b16 %v38
    %v118 = vunpack.c.l.b16 %v39
    %v119 = vunpack.c.l.b16 %v40
    %v120 = vunpack.c.l.b16 %v41
    %v121 = vunpack.c.l.b16 %v42
    %v122 = vunpack.c.l.b16 %v43
    %v123 = vunpack.c.l.b16 %v44
    %v124 = vunpack.c.l.b16 %v45
    %v125 = vpack.c.b16 %v110, %v109
    %v126 = vpack.c.b16 %v112, %v111
    %v127 = vpack.c.b16 %v114, %v113
    %v128 = vpack.c.b16 %v116, %v115
    %v129 = vpack.c.b16 %v118, %v117
    %v130 = vpack.c.b16 %v120, %v119
    %v131 = vpack.c.b16 %v122, %v121
    %v132 = vpack.c.b16 %v124, %v123
    %141 = vmatprep.subr.bf16.mxu0 0
    %142 = vmatpush1.bf16.msra.mxu0 %v125
    %143 = vmatprep.subr.bf16.mxu0 0
    %144 = vmatpush1.bf16.msra.mxu0 %v126
    %145 = vmatprep.subr.bf16.mxu0 0
    %146 = vmatpush1.bf16.msra.mxu0 %v127
    %147 = vmatprep.subr.bf16.mxu0 0
    %148 = vmatpush1.bf16.msra.mxu0 %v128
    %149 = vmatprep.subr.bf16.mxu0 0
    %150 = vmatpush1.bf16.msra.mxu0 %v129
    %151 = vmatprep.subr.bf16.mxu0 0
    %152 = vmatpush1.bf16.msra.mxu0 %v130
    %153 = vmatprep.subr.bf16.mxu0 0
    %154 = vmatpush1.bf16.msra.mxu0 %v131
    %155 = vmatprep.subr.bf16.mxu0 0
    %156 = vmatpush1.bf16.msra.mxu0 %v132
    %157 = vmatprep.subr.bf16.mxu0 0
    %158 = vmatpush1.bf16.msra.mxu0 0
    %159 = vmatprep.subr.bf16.mxu0 0
    %160 = vmatpush1.bf16.msra.mxu0 0
    %161 = vmatprep.subr.bf16.mxu0 0
    %162 = vmatpush1.bf16.msra.mxu0 0
    %163 = vmatprep.subr.bf16.mxu0 0
    %164 = vmatpush1.bf16.msra.mxu0 0
    %165 = vmatprep.subr.bf16.mxu0 0
    %166 = vmatpush1.bf16.msra.mxu0 0
    %167 = vmatprep.subr.bf16.mxu0 0
    %168 = vmatpush1.bf16.msra.mxu0 0
    %169 = vmatprep.subr.bf16.mxu0 0
    %170 = vmatpush1.bf16.msra.mxu0 0
    %171 = vmatprep.subr.bf16.mxu0 0
    %172 = vmatpush1.bf16.msra.mxu0 0
    %173 = vmatprep.mubr.bf16.mxu0 0
    %174 = vmatmul.mubr.bf16.gmra.mrb[0].mxu0 %v91
    %v175 = vpop.f32.mrb[0].mxu0
    %v176 = vadd.f32 %v85, %v175
    %v177 = vpop.f32.mrb[0].mxu0
    %v178 = vpop.f32.mrb[0].mxu0
    %v179 = vadd.f32 %v85, %v178
    %v180 = vpop.f32.mrb[0].mxu0
    %181 = vdwg.mxu0
    %v182 = vmax.f32 %v176, 0.0
    %v183 = vmax.f32 %v179, 0.0
    %v184 = vpack.c.bf16 %v183, %v182
    %v186 = vlaneseq
    %v187 = vshrl.u32 %v186, 7
    %v188 = vsub.s32 0, %v187
    %v189 = vrot.slane %v79, %v188
    %v207 = vunpack.c.l.b16 %v46
    %v208 = vunpack.c.l.b16 %v47
    %v209 = vunpack.c.l.b16 %v48
    %v210 = vunpack.c.l.b16 %v49
    %v211 = vunpack.c.l.b16 %v50
    %v212 = vunpack.c.l.b16 %v51
    %v213 = vunpack.c.l.b16 %v52
    %v214 = vunpack.c.l.b16 %v53
    %v215 = vunpack.c.l.b16 %v54
    %v216 = vunpack.c.l.b16 %v55
    %v217 = vunpack.c.l.b16 %v56
    %v218 = vunpack.c.l.b16 %v57
    %v219 = vunpack.c.l.b16 %v58
    %v220 = vunpack.c.l.b16 %v59
    %v221 = vunpack.c.l.b16 %v60
    %v222 = vunpack.c.l.b16 %v61
    %v223 = vpack.c.b16 %v208, %v207
    %v224 = vpack.c.b16 %v210, %v209
    %v225 = vpack.c.b16 %v212, %v211
    %v226 = vpack.c.b16 %v214, %v213
    %v227 = vpack.c.b16 %v216, %v215
    %v228 = vpack.c.b16 %v218, %v217
    %v229 = vpack.c.b16 %v220, %v219
    %v230 = vpack.c.b16 %v222, %v221
    %239 = vmatprep.subr.bf16.mxu0 0
    %240 = vmatpush1.bf16.msra.mxu0 %v223
    %241 = vmatprep.subr.bf16.mxu0 0
    %242 = vmatpush1.bf16.msra.mxu0 %v224
    %243 = vmatprep.subr.bf16.mxu0 0
    %244 = vmatpush1.bf16.msra.mxu0 %v225
    %245 = vmatprep.subr.bf16.mxu0 0
    %246 = vmatpush1.bf16.msra.mxu0 %v226
    %247 = vmatprep.subr.bf16.mxu0 0
    %248 = vmatpush1.bf16.msra.mxu0 %v227
    %249 = vmatprep.subr.bf16.mxu0 0
    %250 = vmatpush1.bf16.msra.mxu0 %v228
    %251 = vmatprep.subr.bf16.mxu0 0
    %252 = vmatpush1.bf16.msra.mxu0 %v229
    %253 = vmatprep.subr.bf16.mxu0 0
    %254 = vmatpush1.bf16.msra.mxu0 %v230
    %255 = vmatprep.subr.bf16.mxu0 0
    %256 = vmatpush1.bf16.msra.mxu0 0
    %257 = vmatprep.subr.bf16.mxu0 0
    %258 = vmatpush1.bf16.msra.mxu0 0
    %259 = vmatprep.subr.bf16.mxu0 0
    %260 = vmatpush1.bf16.msra.mxu0 0
    %261 = vmatprep.subr.bf16.mxu0 0
    %262 = vmatpush1.bf16.msra.mxu0 0
    %263 = vmatprep.subr.bf16.mxu0 0
    %264 = vmatpush1.bf16.msra.mxu0 0
    %265 = vmatprep.subr.bf16.mxu0 0
    %266 = vmatpush1.bf16.msra.mxu0 0
    %267 = vmatprep.subr.bf16.mxu0 0
    %268 = vmatpush1.bf16.msra.mxu0 0
    %269 = vmatprep.subr.bf16.mxu0 0
    %270 = vmatpush1.bf16.msra.mxu0 0
    %271 = vmatprep.mubr.bf16.mxu0 0
    %272 = vmatmul.mubr.bf16.gmra.mrb[0].mxu0 %v184
    %v273 = vpop.f32.mrb[0].mxu0
    %v274 = vadd.f32 %v189, %v273
    %v275 = vpop.f32.mrb[0].mxu0
    %v276 = vpop.f32.mrb[0].mxu0
    %v277 = vadd.f32 %v189, %v276
    %v278 = vpop.f32.mrb[0].mxu0
    %279 = vdwg.mxu0
    %v280 = vmax.f32 %v274, 0.0
    %v281 = vmax.f32 %v277, 0.0
    %v282 = vadd.f32 %v182, %v280
    %v283 = vadd.f32 %v183, %v281
    %284 = vadd.xlane.f32.xlu0 %v282
    %v285 = vpop.xlane.xlu0 %284
    %286 = vadd.xlane.f32.xlu0 %v283
    %v287 = vpop.xlane.xlu0 %286
    %v288 = vmul.f32 %v282, %v282
    %v289 = vmul.f32 %v283, %v283
    %290 = vadd.xlane.f32.xlu0 %v288
    %v291 = vpop.xlane.xlu0 %290
    %292 = vadd.xlane.f32.xlu0 %v289
    %v293 = vpop.xlane.xlu0 %292
    %v294 = vrcp.pop 64.0
    %v295 = vmul.f32 %v285, %v294
    %v296 = vmul.f32 %v287, %v294
    %v297 = vmul.f32 %v295, 64.0
    %v298 = vmul.f32 %v296, 64.0
    %v299 = vmul.f32 %v297, %v295
    %v300 = vmul.f32 %v298, %v296
    %v301 = vsub.f32 %v291, %v299
    %v302 = vsub.f32 %v293, %v300
    %v303 = vrcp.pop 63.0
    %v304 = vmul.f32 %v301, %v303
    %v305 = vmul.f32 %v302, %v303
    %v306 = vmax.f32 %v304, 0.0
    %v307 = vmax.f32 %v305, 0.0
    %v308 = vrsqrt.pop %v306
    %v309 = vmul.f32 %v306, %v308
    %vm310 = vcmp.eq.f32.partialorder %v306, inf
    %v311 = vsel %vm310, %v306, %v309
    %vm312 = vcmp.eq.f32.partialorder %v306, 0.0
    %v313 = vand.u32 %v306, 2147483648
    %v314 = vsel %vm312, %v313, %v311
    %v315 = vrsqrt.pop %v307
    %v316 = vmul.f32 %v307, %v315
    %vm317 = vcmp.eq.f32.partialorder %v307, inf
    %v318 = vsel %vm317, %v307, %v316
    %vm319 = vcmp.eq.f32.partialorder %v307, 0.0
    %v320 = vand.u32 %v307, 2147483648
    %v321 = vsel %vm319, %v320, %v318
    %v322 = vadd.f32 %v314, 1e-06
    %v323 = vadd.f32 %v321, 1e-06
    %v324 = vrcp.pop %v322
    %v325 = vrcp.pop %v323
    %v326 = vsub.f32 %v282, %v295
    %v327 = vsub.f32 %v283, %v296
    %v328 = vmul.f32 %v326, %v324
    %v329 = vmul.f32 %v327, %v325
    %v330 = vlaneseq
    %v331 = vand.u32 %v330, 127
    %vm332 = vcmp.lt.s32.totalorder %v331, 64
    %v333 = vsel %vm332, %v328, 0.0
    %v334 = vsel %vm332, %v329, 0.0
    %v335 = vpack.c.bf16 %v334, %v333
    %336 = vmatprep.subr.bf16.mxu0 0
    %337 = vmatpush1.bf16.msra.mxu0 %v223
    %338 = vmatprep.subr.bf16.mxu0 0
    %339 = vmatpush1.bf16.msra.mxu0 %v224
    %340 = vmatprep.subr.bf16.mxu0 0
    %341 = vmatpush1.bf16.msra.mxu0 %v225
    %342 = vmatprep.subr.bf16.mxu0 0
    %343 = vmatpush1.bf16.msra.mxu0 %v226
    %344 = vmatprep.subr.bf16.mxu0 0
    %345 = vmatpush1.bf16.msra.mxu0 %v227
    %346 = vmatprep.subr.bf16.mxu0 0
    %347 = vmatpush1.bf16.msra.mxu0 %v228
    %348 = vmatprep.subr.bf16.mxu0 0
    %349 = vmatpush1.bf16.msra.mxu0 %v229
    %350 = vmatprep.subr.bf16.mxu0 0
    %351 = vmatpush1.bf16.msra.mxu0 %v230
    %352 = vmatprep.subr.bf16.mxu0 0
    %353 = vmatpush1.bf16.msra.mxu0 0
    %354 = vmatprep.subr.bf16.mxu0 0
    %355 = vmatpush1.bf16.msra.mxu0 0
    %356 = vmatprep.subr.bf16.mxu0 0
    %357 = vmatpush1.bf16.msra.mxu0 0
    %358 = vmatprep.subr.bf16.mxu0 0
    %359 = vmatpush1.bf16.msra.mxu0 0
    %360 = vmatprep.subr.bf16.mxu0 0
    %361 = vmatpush1.bf16.msra.mxu0 0
    %362 = vmatprep.subr.bf16.mxu0 0
    %363 = vmatpush1.bf16.msra.mxu0 0
    %364 = vmatprep.subr.bf16.mxu0 0
    %365 = vmatpush1.bf16.msra.mxu0 0
    %366 = vmatprep.subr.bf16.mxu0 0
    %367 = vmatpush1.bf16.msra.mxu0 0
    %368 = vmatprep.mubr.bf16.mxu0 0
    %369 = vmatmul.mubr.bf16.gmra.mrb[0].mxu0 %v335
    %v370 = vpop.f32.mrb[0].mxu0
    %v371 = vadd.f32 %v189, %v370
    %v372 = vpop.f32.mrb[0].mxu0
    %v373 = vpop.f32.mrb[0].mxu0
    %v374 = vadd.f32 %v189, %v373
    %v375 = vpop.f32.mrb[0].mxu0
    %376 = vdwg.mxu0
    %v377 = vmax.f32 %v371, 0.0
    %v378 = vmax.f32 %v374, 0.0
    %v379 = vadd.f32 %v333, %v377
    %v380 = vadd.f32 %v334, %v378
    %381 = vadd.xlane.f32.xlu0 %v379
    %v382 = vpop.xlane.xlu0 %381
    %383 = vadd.xlane.f32.xlu0 %v380
    %v384 = vpop.xlane.xlu0 %383
    %v385 = vmul.f32 %v379, %v379
    %v386 = vmul.f32 %v380, %v380
    %387 = vadd.xlane.f32.xlu0 %v385
    %v388 = vpop.xlane.xlu0 %387
    %389 = vadd.xlane.f32.xlu0 %v386
    %v390 = vpop.xlane.xlu0 %389
    %v391 = vmul.f32 %v382, %v294
    %v392 = vmul.f32 %v384, %v294
    %v393 = vmul.f32 %v391, 64.0
    %v394 = vmul.f32 %v392, 64.0
    %v395 = vmul.f32 %v393, %v391
    %v396 = vmul.f32 %v394, %v392
    %v397 = vsub.f32 %v388, %v395
    %v398 = vsub.f32 %v390, %v396
    %v399 = vmul.f32 %v397, %v303
    %v400 = vmul.f32 %v398, %v303
    %v401 = vmax.f32 %v399, 0.0
    %v402 = vmax.f32 %v400, 0.0
    %v403 = vrsqrt.pop %v401
    %v404 = vmul.f32 %v401, %v403
    %vm405 = vcmp.eq.f32.partialorder %v401, inf
    %v406 = vsel %vm405, %v401, %v404
    %vm407 = vcmp.eq.f32.partialorder %v401, 0.0
    %v408 = vand.u32 %v401, 2147483648
    %v409 = vsel %vm407, %v408, %v406
    %v410 = vrsqrt.pop %v402
    %v411 = vmul.f32 %v402, %v410
    %vm412 = vcmp.eq.f32.partialorder %v402, inf
    %v413 = vsel %vm412, %v402, %v411
    %vm414 = vcmp.eq.f32.partialorder %v402, 0.0
    %v415 = vand.u32 %v402, 2147483648
    %v416 = vsel %vm414, %v415, %v413
    %v417 = vadd.f32 %v409, 1e-06
    %v418 = vadd.f32 %v416, 1e-06
    %v419 = vrcp.pop %v417
    %v420 = vrcp.pop %v418
    %v421 = vsub.f32 %v379, %v391
    %v422 = vsub.f32 %v380, %v392
    %v423 = vmul.f32 %v421, %v419
    %v424 = vmul.f32 %v422, %v420
    %v425 = vsel %vm332, %v423, 0.0
    %v426 = vsel %vm332, %v424, 0.0
    %v427 = vpack.c.bf16 %v426, %v425
    %v429 = vlaneseq
    %v430 = vshrl.u32 %v429, 7
    %v431 = vsub.s32 0, %v430
    %v432 = vrot.slane %v80, %v431
    %v450 = vunpack.c.l.b16 %v62
    %v451 = vunpack.c.l.b16 %v63
    %v452 = vunpack.c.l.b16 %v64
    %v453 = vunpack.c.l.b16 %v65
    %v454 = vunpack.c.l.b16 %v66
    %v455 = vunpack.c.l.b16 %v67
    %v456 = vunpack.c.l.b16 %v68
    %v457 = vunpack.c.l.b16 %v69
    %v458 = vunpack.c.l.b16 %v70
    %v459 = vunpack.c.l.b16 %v71
    %v460 = vunpack.c.l.b16 %v72
    %v461 = vunpack.c.l.b16 %v73
    %v462 = vunpack.c.l.b16 %v74
    %v463 = vunpack.c.l.b16 %v75
    %v464 = vunpack.c.l.b16 %v76
    %v465 = vunpack.c.l.b16 %v77
    %v466 = vpack.c.b16 %v451, %v450
    %v467 = vpack.c.b16 %v453, %v452
    %v468 = vpack.c.b16 %v455, %v454
    %v469 = vpack.c.b16 %v457, %v456
    %v470 = vpack.c.b16 %v459, %v458
    %v471 = vpack.c.b16 %v461, %v460
    %v472 = vpack.c.b16 %v463, %v462
    %v473 = vpack.c.b16 %v465, %v464
    %482 = vmatprep.subr.bf16.mxu0 0
    %483 = vmatpush1.bf16.msra.mxu0 %v466
    %484 = vmatprep.subr.bf16.mxu0 0
    %485 = vmatpush1.bf16.msra.mxu0 %v467
    %486 = vmatprep.subr.bf16.mxu0 0
    %487 = vmatpush1.bf16.msra.mxu0 %v468
    %488 = vmatprep.subr.bf16.mxu0 0
    %489 = vmatpush1.bf16.msra.mxu0 %v469
    %490 = vmatprep.subr.bf16.mxu0 0
    %491 = vmatpush1.bf16.msra.mxu0 %v470
    %492 = vmatprep.subr.bf16.mxu0 0
    %493 = vmatpush1.bf16.msra.mxu0 %v471
    %494 = vmatprep.subr.bf16.mxu0 0
    %495 = vmatpush1.bf16.msra.mxu0 %v472
    %496 = vmatprep.subr.bf16.mxu0 0
    %497 = vmatpush1.bf16.msra.mxu0 %v473
    %498 = vmatprep.subr.bf16.mxu0 0
    %499 = vmatpush1.bf16.msra.mxu0 0
    %500 = vmatprep.subr.bf16.mxu0 0
    %501 = vmatpush1.bf16.msra.mxu0 0
    %502 = vmatprep.subr.bf16.mxu0 0
    %503 = vmatpush1.bf16.msra.mxu0 0
    %504 = vmatprep.subr.bf16.mxu0 0
    %505 = vmatpush1.bf16.msra.mxu0 0
    %506 = vmatprep.subr.bf16.mxu0 0
    %507 = vmatpush1.bf16.msra.mxu0 0
    %508 = vmatprep.subr.bf16.mxu0 0
    %509 = vmatpush1.bf16.msra.mxu0 0
    %510 = vmatprep.subr.bf16.mxu0 0
    %511 = vmatpush1.bf16.msra.mxu0 0
    %512 = vmatprep.subr.bf16.mxu0 0
    %513 = vmatpush1.bf16.msra.mxu0 0
    %514 = vmatprep.mubr.bf16.mxu0 0
    %515 = vmatmul.mubr.bf16.gmra.mrb[0].mxu0 %v427
    %v516 = vpop.f32.mrb[0].mxu0
    %v517 = vadd.f32 %v432, %v516
    %v518 = vpop.f32.mrb[0].mxu0
    %v519 = vpop.f32.mrb[0].mxu0
    %v520 = vadd.f32 %v432, %v519
    %v521 = vpop.f32.mrb[0].mxu0
    %522 = vdwg.mxu0
    %v523 = vmax.f32 %v517, 0.0
    %v524 = vmax.f32 %v520, 0.0
    %525 = vadd.xlane.f32.xlu0 %v523
    %v526 = vpop.xlane.xlu0 %525
    %527 = vadd.xlane.f32.xlu0 %v524
    %v528 = vpop.xlane.xlu0 %527
    %v529 = vmul.f32 %v523, %v523
    %v530 = vmul.f32 %v524, %v524
    %531 = vadd.xlane.f32.xlu0 %v529
    %v532 = vpop.xlane.xlu0 %531
    %533 = vadd.xlane.f32.xlu0 %v530
    %v534 = vpop.xlane.xlu0 %533
    %v535 = vrcp.pop 16.0
    %v536 = vmul.f32 %v526, %v535
    %v537 = vmul.f32 %v528, %v535
    %v538 = vmul.f32 %v536, 16.0
    %v539 = vmul.f32 %v537, 16.0
    %v540 = vmul.f32 %v538, %v536
    %v541 = vmul.f32 %v539, %v537
    %v542 = vsub.f32 %v532, %v540
    %v543 = vsub.f32 %v534, %v541
    %v544 = vrcp.pop 15.0
    %v545 = vmul.f32 %v542, %v544
    %v546 = vmul.f32 %v543, %v544
    %v547 = vmax.f32 %v545, 0.0
    %v548 = vmax.f32 %v546, 0.0
    %v549 = vrsqrt.pop %v547
    %v550 = vmul.f32 %v547, %v549
    %vm551 = vcmp.eq.f32.partialorder %v547, inf
    %v552 = vsel %vm551, %v547, %v550
    %vm553 = vcmp.eq.f32.partialorder %v547, 0.0
    %v554 = vand.u32 %v547, 2147483648
    %v555 = vsel %vm553, %v554, %v552
    %v556 = vrsqrt.pop %v548
    %v557 = vmul.f32 %v548, %v556
    %vm558 = vcmp.eq.f32.partialorder %v548, inf
    %v559 = vsel %vm558, %v548, %v557
    %vm560 = vcmp.eq.f32.partialorder %v548, 0.0
    %v561 = vand.u32 %v548, 2147483648
    %v562 = vsel %vm560, %v561, %v559
    %v563 = vadd.f32 %v555, 1e-06
    %v564 = vadd.f32 %v562, 1e-06
    %v565 = vrcp.pop %v563
    %v566 = vrcp.pop %v564
    %v567 = vsub.f32 %v523, %v536
    %v568 = vsub.f32 %v524, %v537
    %v569 = vmul.f32 %v567, %v565
    %v570 = vmul.f32 %v568, %v566
    %vm571 = vcmp.lt.s32.totalorder %v331, 16
    %v572 = vsel %vm571, %v569, 0.0
    %v573 = vsel %vm571, %v570, 0.0
    %574 = vst [vmem:[#allocation2] sm:$0xff] %v572
    %575 = vst [vmem:[#allocation2 + $0x8] sm:$0xff] %v573
    // Predicated region
    $region30: #{feedforward_pallas.1} parent=1 // pred_check
      _
    $region31: #{feedforward_pallas.1} parent=1 // pred_check_branch
      %577 = sbr.rel (0) target = $region33
    $region32: #{feedforward_pallas.1} parent=1 // pred_region
      %s579 = ssub.s32 256, 256
      %580 = vsyncadd [#allocation3], %s579
      %s581 = sshll.u32 [#allocation2], 4
      %s582 = int_to_ptr.vmem [resolvable:$true] %s581
      %587 = dma.vmem_to_hbm [thread:$0]  %s582, 256, %s7, [#allocation3], 128, 128, 8
    $region33: #{feedforward_pallas.1} parent=1 // pred_fallthru
      _
    // Predicated region
    $region34: #{feedforward_pallas.1} parent=1 // pred_check
      _
    $region35: #{feedforward_pallas.1} parent=1 // pred_check_branch
      %589 = sbr.rel (0) target = $region37
    $region36: #{feedforward_pallas.1} parent=1 // pred_region
      %590 = dma.done [#allocation3], 256
    $region37: #{feedforward_pallas.1} parent=1 // pred_fallthru
      _
    %591 = vsyncpa [#allocation3], 1

</llo_original>
